<compile_context>
chip_gen: v6e
topology: v6e:2x2x1
jax: 0.10.0
libtpu: 0.0.40
codegen_flags: <defaults>
</compile_context>

<pallas_src>
import jax
import jax.numpy as jnp
from jax.experimental import pallas as pl
from jax.experimental.pallas import tpu as pltpu


def decoder_kernel(tok_ref, h0_ref, c0_ref, ctx_ref,
                   wg_ref, wf_ref, b_ref,
                   out_ref, h1_ref, c1_ref):
    """Fused embedding + single-step LSTM cell + 2 linears + softmax in VMEM."""
    B, H = h0_ref.shape
    V = out_ref.shape[1]

    # ---- packed biases: [b_lstm (4H) | b1 (H) | b2 (V)] (static slices) ----
    b_lstm = b_ref[:, 0:4 * H]
    b1 = b_ref[:, 4 * H:5 * H]
    b2 = b_ref[:, 5 * H:5 * H + V]

    # ---- embedding as one-hot rows, fused straight into the gate matmul ----
    ids = tok_ref[...]                                            # (B, 1) int32
    cols = jax.lax.broadcasted_iota(jnp.int32, (B, V), 1)         # (B, V)
    onehot = (cols == ids).astype(jnp.bfloat16)                   # (B, V)

    h0 = h0_ref[...]                                              # (B, H) f32
    c0 = c0_ref[...]                                              # (B, H) f32

    # ---- LSTM gates: single K = V+H (=256) matmul on stacked weights ------
    #   W_gates = [[emb @ W_ih]; [W_hh]]  (pre-fused at init, bf16)
    xin = jnp.concatenate([onehot, h0.astype(jnp.bfloat16)], axis=1)  # (B, V+H)
    gates = jnp.dot(xin, wg_ref[...],
                    preferred_element_type=jnp.float32) + b_lstm      # (B, 4H)

    # gate order (i, f, g, o) as in PyTorch; H = 128 -> full-vreg slices.
    i_g = jax.nn.sigmoid(gates[:, 0 * H:1 * H])
    f_g = jax.nn.sigmoid(gates[:, 1 * H:2 * H])
    g_g = jnp.tanh(gates[:, 2 * H:3 * H])
    o_g = jax.nn.sigmoid(gates[:, 3 * H:4 * H])

    c1 = f_g * c0 + i_g * g_g
    h1 = o_g * jnp.tanh(c1)

    # ---- FF1 = [h1 | ctx] @ W1 + b1 ; FF2 = FF1 @ W2 + b2 ------------------
    # wf_ref is the packed slab [W1 (3H,H); W2 (H,V)] (requires V == H here).
    w1 = wf_ref[0:3 * H, :]
    w2 = wf_ref[3 * H:4 * H, :]
    cat = jnp.concatenate([h1.astype(jnp.bfloat16),
                           ctx_ref[...].astype(jnp.bfloat16)], axis=1)  # (B, 3H)
    ff1 = jnp.dot(cat, w1, preferred_element_type=jnp.float32) + b1      # (B, H)
    ff2 = jnp.dot(ff1.astype(jnp.bfloat16), w2,
                  preferred_element_type=jnp.float32) + b2               # (B, V)

    # ---- softmax over vocab (dim=1), f32, exact normalization --------------
    m = jnp.max(ff2, axis=1, keepdims=True)
    e = jnp.exp(ff2 - m)
    denom = jnp.sum(e, axis=1, keepdims=True)
    out_ref[...] = e / denom

    h1_ref[...] = h1
    c1_ref[...] = c1


def decoder_forward(x_tokens, pre_hidden, context, params):
    """JAX wrapper matching Decoder.forward semantics.

    x_tokens  : (B, 1) int32 token ids
    pre_hidden: tuple (h, c), each (1, B, H)  -- PyTorch LSTM hidden layout
    context   : (B, 2H) float32
    returns   : (out (B, V), (h1 (1, B, H), c1 (1, B, H)))
    """
    B = x_tokens.shape[0]
    H = pre_hidden[0].shape[-1]
    V = params["W_gates"].shape[0] - H

    h0 = pre_hidden[0][0]  # (B, H)
    c0 = pre_hidden[1][0]  # (B, H)

    vmem = pl.BlockSpec(memory_space=pltpu.MemorySpace.VMEM)

    out, h1, c1 = pl.pallas_call(
        decoder_kernel,
        out_shape=(
            jax.ShapeDtypeStruct((B, V), jnp.float32),
            jax.ShapeDtypeStruct((B, H), jnp.float32),
            jax.ShapeDtypeStruct((B, H), jnp.float32),
        ),
        in_specs=[vmem] * 7,
        out_specs=(vmem, vmem, vmem),
        compiler_params=pltpu.CompilerParams(vmem_limit_bytes=4 * 1024 * 1024),
    )(x_tokens.astype(jnp.int32), h0, c0, context,
      params["W_gates"], params["W_ff"], params["b_pack"])

    return out, (h1[None, ...], c1[None, ...])


def decoder_reference(x_tokens, pre_hidden, context, params):
    """Pure-JAX f32 reference on the same packed bf16 weights (mirrors casts)."""
    f32 = jnp.float32
    bf16 = jnp.bfloat16
    h0 = pre_hidden[0][0]
    c0 = pre_hidden[1][0]
    H = h0.shape[-1]
    wg = params["W_gates"].astype(f32)           # (V+H, 4H)
    wf = params["W_ff"].astype(f32)              # (4H, H)
    V = wg.shape[0] - H
    b = params["b_pack"]
    b_lstm, b1, b2 = b[:, :4 * H], b[:, 4 * H:5 * H], b[:, 5 * H:5 * H + V]

    emb_wih = wg[:V]                              # fused emb @ W_ih rows
    w_hh = wg[V:]
    gates = (jnp.take(emb_wih, x_tokens[:, 0], axis=0)
             + h0.astype(bf16).astype(f32) @ w_hh + b_lstm)
    i_g = jax.nn.sigmoid(gates[:, 0 * H:1 * H])
    f_g = jax.nn.sigmoid(gates[:, 1 * H:2 * H])
    g_g = jnp.tanh(gates[:, 2 * H:3 * H])
    o_g = jax.nn.sigmoid(gates[:, 3 * H:4 * H])
    c1 = f_g * c0 + i_g * g_g
    h1 = o_g * jnp.tanh(c1)

    cat = jnp.concatenate([h1.astype(bf16).astype(f32),
                           context.astype(bf16).astype(f32)], axis=1)
    ff1 = cat @ wf[:3 * H] + b1
    ff2 = ff1.astype(bf16).astype(f32) @ wf[3 * H:] + b2
    out = jax.nn.softmax(ff2, axis=1)
    return out, (h1[None, ...], c1[None, ...])


def init_params(key, vocab_size, embedding_dim, hidden_dim):
    V, E, H = vocab_size, embedding_dim, hidden_dim
    # Packing W1/W2 into one slab needs matching lane widths (V == H here).
    assert V == H, "W_ff packing assumes vocab == hidden; split arrays otherwise"
    ks = jax.random.split(key, 8)
    scale = 0.1
    f32 = jnp.float32
    bf16 = jnp.bfloat16

    emb = scale * jax.random.normal(ks[0], (V, E), f32)            # Embedding (V, E)
    W_ih = scale * jax.random.normal(ks[1], (E, 4 * H), f32)       # gate order (i,f,g,o)
    W_hh = scale * jax.random.normal(ks[2], (H, 4 * H), f32)
    b_lstm = scale * jax.random.normal(ks[3], (1, 4 * H), f32)     # b_ih + b_hh combined
    W1 = scale * jax.random.normal(ks[4], (3 * H, H), f32)         # L1: 3H -> H
    b1 = scale * jax.random.normal(ks[5], (1, H), f32)
    W2 = scale * jax.random.normal(ks[6], (H, V), f32)             # L2: H -> V
    b2 = scale * jax.random.normal(ks[7], (1, V), f32)

    # Pre-fuse embedding into the LSTM input projection and stack with W_hh so
    # the kernel's gate GEMM is one K = V+H matmul.
    emb_wih = emb @ W_ih                                           # (V, 4H) f32
    W_gates = jnp.concatenate([emb_wih, W_hh], axis=0).astype(bf16)  # (V+H, 4H)
    # Output-path weight slab [W1; W2] and packed bias row (single DMAs each).
    W_ff = jnp.concatenate([W1, W2], axis=0).astype(bf16)            # (4H, H)
    b_pack = jnp.concatenate([b_lstm, b1, b2], axis=1)               # (1, 4H+H+V)

    return {"W_gates": W_gates, "W_ff": W_ff, "b_pack": b_pack}


if __name__ == "__main__":
    # Shapes consistent with the module (HIDDEN_DIM=128, EMBEDDING_DIM=INPUT_DIM=len(vocab)):
    # 128-lane dense; batch = 8 (beam width folded into batch, sublane-aligned).
    # Throughput scales nearly linearly with B up to ~128 — grow it if the
    # decode loop allows.
    B = 8            # batch (beams)
    V = 128          # input_dim == vocab size
    E = 128          # embedding_dim
    H = 128          # hidden_dim

    key = jax.random.PRNGKey(0)
    kp, kx, kh, kc, kctx = jax.random.split(key, 5)

    params = init_params(kp, V, E, H)

    x = jax.random.randint(kx, (B, 1), 0, V, dtype=jnp.int32)          # (B, 1) token ids
    h0 = 0.1 * jax.random.normal(kh, (1, B, H), jnp.float32)            # LSTM hidden
    c0 = 0.1 * jax.random.normal(kc, (1, B, H), jnp.float32)            # LSTM cell
    context = 0.1 * jax.random.normal(kctx, (B, 2 * H), jnp.float32)    # attention context

    out, (h1, c1) = decoder_forward(x, (h0, c0), context, params)
    jax.block_until_ready((out, h1, c1))

    assert out.shape == (B, V)
    assert h1.shape == (1, B, H) and c1.shape == (1, B, H)
    # exact softmax normalization: rows sum to 1 to f32 precision
    assert bool(jnp.allclose(jnp.sum(out, axis=1), 1.0, atol=1e-5))

    # numerical check against pure-JAX reference on the same packed bf16 weights
    ref_out, (ref_h1, ref_c1) = decoder_reference(x, (h0, c0), context, params)
    assert bool(jnp.allclose(out, ref_out, atol=2e-2))
    assert bool(jnp.allclose(h1, ref_h1, atol=2e-2))
    assert bool(jnp.allclose(c1, ref_c1, atol=2e-2))

    print("KERNEL_OK")
</pallas_src>

<mosaic_0001>
module attributes {stable_mosaic.version = 11 : i64} {
  func.func @decoder_kernel(%arg0: memref<8x1xi32, #tpu.memory_space<vmem>>, %arg1: memref<8x128xf32, #tpu.memory_space<vmem>>, %arg2: memref<8x128xf32, #tpu.memory_space<vmem>>, %arg3: memref<8x256xf32, #tpu.memory_space<vmem>>, %arg4: memref<256x512xbf16, #tpu.memory_space<vmem>>, %arg5: memref<512x128xbf16, #tpu.memory_space<vmem>>, %arg6: memref<1x768xf32, #tpu.memory_space<vmem>>, %arg7: memref<8x128xf32, #tpu.memory_space<vmem>>, %arg8: memref<8x128xf32, #tpu.memory_space<vmem>>, %arg9: memref<8x128xf32, #tpu.memory_space<vmem>>) attributes {dimension_semantics = [], scalar_prefetch = 0 : i64, scratch_operands = 0 : i64, tpu.core_type = #tpu.core_type<tc>} {
    %c0 = arith.constant 0 : index
    %c0_0 = arith.constant 0 : index
    %0 = vector.load %arg6[%c0, %c0_0] : memref<1x768xf32, #tpu.memory_space<vmem>>, vector<1x512xf32>
    %c0_1 = arith.constant 0 : index
    %c512 = arith.constant 512 : index
    %1 = vector.load %arg6[%c0_1, %c512] : memref<1x768xf32, #tpu.memory_space<vmem>>, vector<1x128xf32>
    %c0_2 = arith.constant 0 : index
    %c640 = arith.constant 640 : index
    %2 = vector.load %arg6[%c0_2, %c640] : memref<1x768xf32, #tpu.memory_space<vmem>>, vector<1x128xf32>
    %c0_3 = arith.constant 0 : index
    %c0_4 = arith.constant 0 : index
    %3 = vector.load %arg0[%c0_3, %c0_4] : memref<8x1xi32, #tpu.memory_space<vmem>>, vector<8x1xi32>
    %4 = tpu.iota {dimensions = array<i32: 1>} : vector<8x128xi32>
    %5 = vector.broadcast %3 : vector<8x1xi32> to vector<8x128xi32>
    %6 = arith.cmpi eq, %4, %5 : vector<8x128xi32>
    %7 = arith.extui %6 : vector<8x128xi1> to vector<8x128xi32>
    %8 = arith.sitofp %7 : vector<8x128xi32> to vector<8x128xf32>
    %9 = arith.truncf %8 : vector<8x128xf32> to vector<8x128xbf16>
    %c0_5 = arith.constant 0 : index
    %c0_6 = arith.constant 0 : index
    %10 = vector.load %arg1[%c0_5, %c0_6] : memref<8x128xf32, #tpu.memory_space<vmem>>, vector<8x128xf32>
    %c0_7 = arith.constant 0 : index
    %c0_8 = arith.constant 0 : index
    %11 = vector.load %arg2[%c0_7, %c0_8] : memref<8x128xf32, #tpu.memory_space<vmem>>, vector<8x128xf32>
    %12 = arith.truncf %10 : vector<8x128xf32> to vector<8x128xbf16>
    %13 = tpu.concatenate %9, %12 in 1 : vector<8x128xbf16>, vector<8x128xbf16> -> vector<8x256xbf16>
    %c0_9 = arith.constant 0 : index
    %c0_10 = arith.constant 0 : index
    %14 = vector.load %arg4[%c0_9, %c0_10] : memref<256x512xbf16, #tpu.memory_space<vmem>>, vector<256x512xbf16>
    %cst = arith.constant dense<0.000000e+00> : vector<8x512xf32>
    %15 = tpu.matmul %13, %14, %cst {dimension_numbers = #tpu.dot_dimension_numbers<[1], [0], [0], [1], [0, 0, 1, 1], [], []>} : vector<8x256xbf16>, vector<256x512xbf16>, vector<8x512xf32> -> vector<8x512xf32>
    %16 = vector.broadcast %0 : vector<1x512xf32> to vector<8x512xf32>
    %17 = arith.addf %15, %16 : vector<8x512xf32>
    %18 = vector.extract_strided_slice %17 {offsets = [0, 0], sizes = [8, 128], strides = [1, 1]} : vector<8x512xf32> to vector<8x128xf32>
    %19 = arith.negf %18 : vector<8x128xf32>
    %20 = math.exp %19 : vector<8x128xf32>
    %cst_11 = arith.constant 1.000000e+00 : f32
    %21 = vector.broadcast %cst_11 : f32 to vector<8x128xf32>
    %22 = arith.addf %21, %20 : vector<8x128xf32>
    %23 = arith.divf %21, %22 : vector<8x128xf32>
    %24 = vector.extract_strided_slice %17 {offsets = [0, 128], sizes = [8, 128], strides = [1, 1]} : vector<8x512xf32> to vector<8x128xf32>
    %25 = arith.negf %24 : vector<8x128xf32>
    %26 = math.exp %25 : vector<8x128xf32>
    %cst_12 = arith.constant 1.000000e+00 : f32
    %27 = vector.broadcast %cst_12 : f32 to vector<8x128xf32>
    %28 = arith.addf %27, %26 : vector<8x128xf32>
    %29 = arith.divf %27, %28 : vector<8x128xf32>
    %30 = vector.extract_strided_slice %17 {offsets = [0, 256], sizes = [8, 128], strides = [1, 1]} : vector<8x512xf32> to vector<8x128xf32>
    %31 = math.tanh %30 : vector<8x128xf32>
    %32 = vector.extract_strided_slice %17 {offsets = [0, 384], sizes = [8, 128], strides = [1, 1]} : vector<8x512xf32> to vector<8x128xf32>
    %33 = arith.negf %32 : vector<8x128xf32>
    %34 = math.exp %33 : vector<8x128xf32>
    %cst_13 = arith.constant 1.000000e+00 : f32
    %35 = vector.broadcast %cst_13 : f32 to vector<8x128xf32>
    %36 = arith.addf %35, %34 : vector<8x128xf32>
    %37 = arith.divf %35, %36 : vector<8x128xf32>
    %38 = arith.mulf %29, %11 : vector<8x128xf32>
    %39 = arith.mulf %23, %31 : vector<8x128xf32>
    %40 = arith.addf %38, %39 : vector<8x128xf32>
    %41 = math.tanh %40 : vector<8x128xf32>
    %42 = arith.mulf %37, %41 : vector<8x128xf32>
    %c0_14 = arith.constant 0 : index
    %c0_15 = arith.constant 0 : index
    %43 = vector.load %arg5[%c0_14, %c0_15] : memref<512x128xbf16, #tpu.memory_space<vmem>>, vector<384x128xbf16>
    %c384 = arith.constant 384 : index
    %c0_16 = arith.constant 0 : index
    %44 = vector.load %arg5[%c384, %c0_16] : memref<512x128xbf16, #tpu.memory_space<vmem>>, vector<128x128xbf16>
    %45 = arith.truncf %42 : vector<8x128xf32> to vector<8x128xbf16>
    %c0_17 = arith.constant 0 : index
    %c0_18 = arith.constant 0 : index
    %46 = vector.load %arg3[%c0_17, %c0_18] : memref<8x256xf32, #tpu.memory_space<vmem>>, vector<8x256xf32>
    %47 = arith.truncf %46 : vector<8x256xf32> to vector<8x256xbf16>
    %48 = tpu.concatenate %45, %47 in 1 : vector<8x128xbf16>, vector<8x256xbf16> -> vector<8x384xbf16>
    %cst_19 = arith.constant dense<0.000000e+00> : vector<8x128xf32>
    %49 = tpu.matmul %48, %43, %cst_19 {dimension_numbers = #tpu.dot_dimension_numbers<[1], [0], [0], [1], [0, 0, 1, 1], [], []>} : vector<8x384xbf16>, vector<384x128xbf16>, vector<8x128xf32> -> vector<8x128xf32>
    %50 = vector.broadcast %1 : vector<1x128xf32> to vector<8x128xf32>
    %51 = arith.addf %49, %50 : vector<8x128xf32>
    %52 = arith.truncf %51 : vector<8x128xf32> to vector<8x128xbf16>
    %cst_20 = arith.constant dense<0.000000e+00> : vector<8x128xf32>
    %53 = tpu.matmul %52, %44, %cst_20 {dimension_numbers = #tpu.dot_dimension_numbers<[1], [0], [0], [1], [0, 0, 1, 1], [], []>} : vector<8x128xbf16>, vector<128x128xbf16>, vector<8x128xf32> -> vector<8x128xf32>
    %54 = vector.broadcast %2 : vector<1x128xf32> to vector<8x128xf32>
    %55 = arith.addf %53, %54 : vector<8x128xf32>
    %cst_21 = arith.constant dense<0xFF800000> : vector<8xf32>
    %56 = vector.multi_reduction <maximumf>, %55, %cst_21 [1] : vector<8x128xf32> to vector<8xf32>
    %57 = vector.shape_cast %56 : vector<8xf32> to vector<8x1xf32>
    %58 = vector.broadcast %57 : vector<8x1xf32> to vector<8x128xf32>
    %59 = arith.subf %55, %58 : vector<8x128xf32>
    %60 = math.exp %59 : vector<8x128xf32>
    %cst_22 = arith.constant dense<0.000000e+00> : vector<8xf32>
    %61 = vector.multi_reduction <add>, %60, %cst_22 [1] : vector<8x128xf32> to vector<8xf32>
    %62 = vector.shape_cast %61 : vector<8xf32> to vector<8x1xf32>
    %63 = vector.broadcast %62 : vector<8x1xf32> to vector<8x128xf32>
    %64 = arith.divf %60, %63 : vector<8x128xf32>
    %c0_23 = arith.constant 0 : index
    %c0_24 = arith.constant 0 : index
    %65 = vector.load %arg7[%c0_23, %c0_24] : memref<8x128xf32, #tpu.memory_space<vmem>>, vector<8x128xf32>
    tpu.vector_store %arg7[%c0_23, %c0_24], %64 {strides = array<i32>} : memref<8x128xf32, #tpu.memory_space<vmem>>, vector<8x128xf32>,
    %c0_25 = arith.constant 0 : index
    %c0_26 = arith.constant 0 : index
    %66 = vector.load %arg8[%c0_25, %c0_26] : memref<8x128xf32, #tpu.memory_space<vmem>>, vector<8x128xf32>
    tpu.vector_store %arg8[%c0_25, %c0_26], %42 {strides = array<i32>} : memref<8x128xf32, #tpu.memory_space<vmem>>, vector<8x128xf32>,
    %c0_27 = arith.constant 0 : index
    %c0_28 = arith.constant 0 : index
    %67 = vector.load %arg9[%c0_27, %c0_28] : memref<8x128xf32, #tpu.memory_space<vmem>>, vector<8x128xf32>
    tpu.vector_store %arg9[%c0_27, %c0_28], %40 {strides = array<i32>} : memref<8x128xf32, #tpu.memory_space<vmem>>, vector<8x128xf32>,
    return
  }
}

</mosaic_0001>

<llo_original>
// kernel: tpu_custom_call.1
$region0: #{tpu_custom_call.1}
  #allocation0 [shape = 'u32[]', space=smem, size = 0x4, offset = 0x4, fixed_abs, tag = 'smem constant byte address 0x4 - core index']
  #allocation1 [shape = 'u32[144,128]{1,0:T(1,128)}', space=vmem, size = 0x12000, scoped, tag = 'internal scratch']
  %s0 = inlined_call_operand.vmem [shape: s32[8,1], index: 0, kind: input, shape index: {}]
  %s1 = inlined_call_operand.vmem [shape: f32[8,128], index: 1, kind: input, shape index: {}]
  %s2 = inlined_call_operand.hbm [shape: f32[8,128], index: 2, kind: input, shape index: {}]
  %s3 = inlined_call_operand.hbm [shape: f32[8,256], index: 3, kind: input, shape index: {}]
  %s4 = inlined_call_operand.hbm [shape: bf16[256,512], index: 4, kind: input, shape index: {}]
  %s5 = inlined_call_operand.hbm [shape: bf16[512,128], index: 5, kind: input, shape index: {}]
  %s6 = inlined_call_operand.vmem [shape: f32[1,768], index: 6, kind: input, shape index: {}]
  %s7 = inlined_call_operand.hbm [shape: f32[8,128], index: 7, kind: output, shape index: {0}]
  %s8 = inlined_call_operand.hbm [shape: f32[8,128], index: 8, kind: output, shape index: {1}]
  %s9 = inlined_call_operand.hbm [shape: f32[8,128], index: 9, kind: output, shape index: {2}]
  %10 = xla_tuple %s7, %s8, %s9
  %s11 = sld [smem:[#allocation0]]
  $region70: #{tpu_custom_call.1} parent=0
    _
  %s13 = ssub.s32 1, %s11
  %s14 = scalar_select 0, %s13, %s11
  $region1: #{tpu_custom_call.1} parent=0
    #allocation2 [shape = 'u8[4096]{0}', space=vmem, size = 0x1000, scoped, tag = 'input window, operand 2, single buffered']
    #allocation3 [shape = 's32[1]{0}', space=sflag, size = 0x4, scoped, tag = 'scoped memory for tpu_custom_call.1']
    #allocation4 [shape = 's32[1]{0}', space=sflag, size = 0x4, scoped, tag = 'scoped memory for tpu_custom_call.1']
    #allocation5 [shape = 'u8[8192]{0}', space=vmem, size = 0x2000, scoped, tag = 'input window, operand 3, single buffered']
    #allocation6 [shape = 's32[1]{0}', space=sflag, size = 0x4, scoped, tag = 'scoped memory for tpu_custom_call.1']
    #allocation7 [shape = 'u8[262144]{0}', space=vmem, size = 0x40000, scoped, tag = 'input window, operand 4, single buffered']
    #allocation8 [shape = 'u8[131072]{0}', space=vmem, size = 0x20000, scoped, tag = 'input window, operand 5, single buffered']
    #allocation9 [shape = 's32[1]{0}', space=sflag, size = 0x4, scoped, tag = 'scoped memory for tpu_custom_call.1']
    #allocation10 [shape = 'u8[4096]{0}', space=vmem, size = 0x1000, scoped, tag = 'output window, operand 0, single buffered']
    #allocation11 [shape = 'u8[4096]{0}', space=vmem, size = 0x1000, scoped, tag = 'output window, operand 1, single buffered']
    #allocation12 [shape = 's32[1]{0}', space=sflag, size = 0x4, scoped, tag = 'scoped memory for tpu_custom_call.1']
    #allocation13 [shape = 'u8[4096]{0}', space=vmem, size = 0x1000, scoped, tag = 'output window, operand 2, single buffered']
    %15 = vsyncpa [#allocation3], 0
    %16 = vsyncpa [#allocation6], 0
    %17 = vsyncpa [#allocation9], 0
    %18 = vsyncpa [#allocation4], 0
    %19 = vsyncpa [#allocation12], 0
    // Predicated region
    $region2: #{tpu_custom_call.1} parent=1 // pred_check
      _
    $region3: #{tpu_custom_call.1} parent=1 // pred_check_branch
      %21 = sbr.rel (0) target = $region5
    $region4: #{tpu_custom_call.1} parent=1 // pred_region
      _
    $region5: #{tpu_custom_call.1} parent=1 // pred_fallthru
      _
    // Predicated region
    $region6: #{tpu_custom_call.1} parent=1 // pred_check
      _
    $region7: #{tpu_custom_call.1} parent=1 // pred_check_branch
      %23 = sbr.rel (0) target = $region9
    $region8: #{tpu_custom_call.1} parent=1 // pred_region
      _
    $region9: #{tpu_custom_call.1} parent=1 // pred_fallthru
      _
    // Predicated region
    $region10: #{tpu_custom_call.1} parent=1 // pred_check
      _
    $region11: #{tpu_custom_call.1} parent=1 // pred_check_branch
      %25 = sbr.rel (0) target = $region13
    $region12: #{tpu_custom_call.1} parent=1 // pred_region
      %s27 = ssub.s32 128, 128
      %28 = vsyncadd [#allocation3], %s27
      %s30 = sshll.u32 [#allocation2], 4
      %s31 = int_to_ptr.vmem [resolvable:$true] %s30
      %33 = dma.hbm_to_vmem [thread:$0]  %s2, 128, %s31, [#allocation3]
    $region13: #{tpu_custom_call.1} parent=1 // pred_fallthru
      _
    // Predicated region
    $region14: #{tpu_custom_call.1} parent=1 // pred_check
      _
    $region15: #{tpu_custom_call.1} parent=1 // pred_check_branch
      %35 = sbr.rel (0) target = $region17
    $region16: #{tpu_custom_call.1} parent=1 // pred_region
      %s37 = ssub.s32 256, 256
      %38 = vsyncadd [#allocation6], %s37
      %s40 = sshll.u32 [#allocation5], 4
      %s41 = int_to_ptr.vmem [resolvable:$true] %s40
      %43 = dma.hbm_to_vmem [thread:$0]  %s3, 256, %s41, [#allocation6]
    $region17: #{tpu_custom_call.1} parent=1 // pred_fallthru
      _
    // Predicated region
    $region18: #{tpu_custom_call.1} parent=1 // pred_check
      _
    $region19: #{tpu_custom_call.1} parent=1 // pred_check_branch
      %45 = sbr.rel (0) target = $region21
    $region20: #{tpu_custom_call.1} parent=1 // pred_region
      %s47 = ssub.s32 8192, 8192
      %48 = vsyncadd [#allocation6], %s47
      %s49 = sshll.u32 [#allocation7], 4
      %s50 = int_to_ptr.vmem [resolvable:$true] %s49
      %55 = dma.hbm_to_vmem [thread:$0]  %s4, 8192, %s50, [#allocation6], 256, 256, 16
    $region21: #{tpu_custom_call.1} parent=1 // pred_fallthru
      _
    // Predicated region
    $region22: #{tpu_custom_call.1} parent=1 // pred_check
      _
    $region23: #{tpu_custom_call.1} parent=1 // pred_check_branch
      %57 = sbr.rel (0) target = $region25
    $region24: #{tpu_custom_call.1} parent=1 // pred_region
      %s59 = ssub.s32 4096, 4096
      %60 = vsyncadd [#allocation9], %s59
      %s61 = sshll.u32 [#allocation8], 4
      %s62 = int_to_ptr.vmem [resolvable:$true] %s61
      %67 = dma.hbm_to_vmem [thread:$0]  %s5, 4096, %s62, [#allocation9], 64, 64, 4
    $region25: #{tpu_custom_call.1} parent=1 // pred_fallthru
      _
    // Predicated region
    $region26: #{tpu_custom_call.1} parent=1 // pred_check
      _
    $region27: #{tpu_custom_call.1} parent=1 // pred_check_branch
      %69 = sbr.rel (0) target = $region29
    $region28: #{tpu_custom_call.1} parent=1 // pred_region
      _
    $region29: #{tpu_custom_call.1} parent=1 // pred_fallthru
      _
    // Predicated region
    $region30: #{tpu_custom_call.1} parent=1 // pred_check
      _
    $region31: #{tpu_custom_call.1} parent=1 // pred_check_branch
      %71 = sbr.rel (0) target = $region33
    $region32: #{tpu_custom_call.1} parent=1 // pred_region
      %72 = dma.done [#allocation3], 128
    $region33: #{tpu_custom_call.1} parent=1 // pred_fallthru
      _
    // Predicated region
    $region34: #{tpu_custom_call.1} parent=1 // pred_check
      _
    $region35: #{tpu_custom_call.1} parent=1 // pred_check_branch
      %74 = sbr.rel (0) target = $region37
    $region36: #{tpu_custom_call.1} parent=1 // pred_region
      %75 = dma.done [#allocation6], 256
    $region37: #{tpu_custom_call.1} parent=1 // pred_fallthru
      _
    // Predicated region
    $region38: #{tpu_custom_call.1} parent=1 // pred_check
      _
    $region39: #{tpu_custom_call.1} parent=1 // pred_check_branch
      %77 = sbr.rel (0) target = $region41
    $region40: #{tpu_custom_call.1} parent=1 // pred_region
      %78 = dma.done [#allocation6], 8192
    $region41: #{tpu_custom_call.1} parent=1 // pred_fallthru
      _
    // Predicated region
    $region42: #{tpu_custom_call.1} parent=1 // pred_check
      _
    $region43: #{tpu_custom_call.1} parent=1 // pred_check_branch
      %80 = sbr.rel (0) target = $region45
    $region44: #{tpu_custom_call.1} parent=1 // pred_region
      %81 = dma.done [#allocation9], 4096
    $region45: #{tpu_custom_call.1} parent=1 // pred_fallthru
      _
    %v83 = vld [vmem:[%s6] sm:$0xf]
    %v84 = vld [vmem:[%s6 + $0x4] sm:$0x1]
    %v85 = vld [vmem:[%s6 + $0x5] sm:$0x1]
    %v86 = vld [vmem:[%s0] sm:$0xff]
    %v87 = vlaneseq
    %v88 = vand.u32 %v87, 127
    %89 = vset.pattern.permute.xlu0 0
    %90 = vperm.xlu0 %89, %v86
    %v91 = vpop.permute.xlu0 %90
    %vm92 = vcmp.eq.s32.totalorder %v88, %v91
    %v93 = vsel %vm92, 1, 0
    %v94 = vcvt.s32.f32 %v93
    %v95 = vpack.c.bf16 %v94, %v94
    %v96 = vld [vmem:[%s1] sm:$0xff]
    %v97 = vld [vmem:[#allocation2] sm:$0xff]
    %v98 = vpack.c.bf16 %v96, %v96
    %v99 = vld [vmem:[#allocation7] sm:$0xff]
    %v100 = vld [vmem:[#allocation7 + $0x8] sm:$0xff]
    %v101 = vld [vmem:[#allocation7 + $0x10] sm:$0xff]
    %v102 = vld [vmem:[#allocation7 + $0x18] sm:$0xff]
    %v103 = vld [vmem:[#allocation7 + $0x20] sm:$0xff]
    %v104 = vld [vmem:[#allocation7 + $0x28] sm:$0xff]
    %v105 = vld [vmem:[#allocation7 + $0x30] sm:$0xff]
    %v106 = vld [vmem:[#allocation7 + $0x38] sm:$0xff]
    %v107 = vld [vmem:[#allocation7 + $0x40] sm:$0xff]
    %v108 = vld [vmem:[#allocation7 + $0x48] sm:$0xff]
    %v109 = vld [vmem:[#allocation7 + $0x50] sm:$0xff]
    %v110 = vld [vmem:[#allocation7 + $0x58] sm:$0xff]
    %v111 = vld [vmem:[#allocation7 + $0x60] sm:$0xff]
    %v112 = vld [vmem:[#allocation7 + $0x68] sm:$0xff]
    %v113 = vld [vmem:[#allocation7 + $0x70] sm:$0xff]
    %v114 = vld [vmem:[#allocation7 + $0x78] sm:$0xff]
    %v115 = vld [vmem:[#allocation7 + $0x80] sm:$0xff]
    %v116 = vld [vmem:[#allocation7 + $0x88] sm:$0xff]
    %v117 = vld [vmem:[#allocation7 + $0x90] sm:$0xff]
    %v118 = vld [vmem:[#allocation7 + $0x98] sm:$0xff]
    %v119 = vld [vmem:[#allocation7 + $0xa0] sm:$0xff]
    %v120 = vld [vmem:[#allocation7 + $0xa8] sm:$0xff]
    %v121 = vld [vmem:[#allocation7 + $0xb0] sm:$0xff]
    %v122 = vld [vmem:[#allocation7 + $0xb8] sm:$0xff]
    %v123 = vld [vmem:[#allocation7 + $0xc0] sm:$0xff]
    %v124 = vld [vmem:[#allocation7 + $0xc8] sm:$0xff]
    %v125 = vld [vmem:[#allocation7 + $0xd0] sm:$0xff]
    %v126 = vld [vmem:[#allocation7 + $0xd8] sm:$0xff]
    %v127 = vld [vmem:[#allocation7 + $0xe0] sm:$0xff]
    %v128 = vld [vmem:[#allocation7 + $0xe8] sm:$0xff]
    %v129 = vld [vmem:[#allocation7 + $0xf0] sm:$0xff]
    %v130 = vld [vmem:[#allocation7 + $0xf8] sm:$0xff]
    %v131 = vld [vmem:[#allocation7 + $0x100] sm:$0xff]
    %v132 = vld [vmem:[#allocation7 + $0x108] sm:$0xff]
    %v133 = vld [vmem:[#allocation7 + $0x110] sm:$0xff]
    %v134 = vld [vmem:[#allocation7 + $0x118] sm:$0xff]
    %v135 = vld [vmem:[#allocation7 + $0x120] sm:$0xff]
    %v136 = vld [vmem:[#allocation7 + $0x128] sm:$0xff]
    %v137 = vld [vmem:[#allocation7 + $0x130] sm:$0xff]
    %v138 = vld [vmem:[#allocation7 + $0x138] sm:$0xff]
    %v139 = vld [vmem:[#allocation7 + $0x140] sm:$0xff]
    %v140 = vld [vmem:[#allocation7 + $0x148] sm:$0xff]
    %v141 = vld [vmem:[#allocation7 + $0x150] sm:$0xff]
    %v142 = vld [vmem:[#allocation7 + $0x158] sm:$0xff]
    %v143 = vld [vmem:[#allocation7 + $0x160] sm:$0xff]
    %v144 = vld [vmem:[#allocation7 + $0x168] sm:$0xff]
    %v145 = vld [vmem:[#allocation7 + $0x170] sm:$0xff]
    %v146 = vld [vmem:[#allocation7 + $0x178] sm:$0xff]
    %v147 = vld [vmem:[#allocation7 + $0x180] sm:$0xff]
    %v148 = vld [vmem:[#allocation7 + $0x188] sm:$0xff]
    %v149 = vld [vmem:[#allocation7 + $0x190] sm:$0xff]
    %v150 = vld [vmem:[#allocation7 + $0x198] sm:$0xff]
    %v151 = vld [vmem:[#allocation7 + $0x1a0] sm:$0xff]
    %v152 = vld [vmem:[#allocation7 + $0x1a8] sm:$0xff]
    %v153 = vld [vmem:[#allocation7 + $0x1b0] sm:$0xff]
    %v154 = vld [vmem:[#allocation7 + $0x1b8] sm:$0xff]
    %v155 = vld [vmem:[#allocation7 + $0x1c0] sm:$0xff]
    %v156 = vld [vmem:[#allocation7 + $0x1c8] sm:$0xff]
    %v157 = vld [vmem:[#allocation7 + $0x1d0] sm:$0xff]
    %v158 = vld [vmem:[#allocation7 + $0x1d8] sm:$0xff]
    %v159 = vld [vmem:[#allocation7 + $0x1e0] sm:$0xff]
    %v160 = vld [vmem:[#allocation7 + $0x1e8] sm:$0xff]
    %v161 = vld [vmem:[#allocation7 + $0x1f0] sm:$0xff]
    %v162 = vld [vmem:[#allocation7 + $0x1f8] sm:$0xff]
    %v164 = vlaneseq
    %v165 = vshrl.u32 %v164, 7
    %v166 = vsub.s32 0, %v165
    %v167 = vrot.slane %v83, %v166
    %v168 = vlaneseq
    %v169 = vshrl.u32 %v168, 7
    %v170 = vsub.s32 1, %v169
    %v171 = vrot.slane %v83, %v170
    %v172 = vlaneseq
    %v173 = vshrl.u32 %v172, 7
    %v174 = vsub.s32 2, %v173
    %v175 = vrot.slane %v83, %v174
    %v176 = vlaneseq
    %v177 = vshrl.u32 %v176, 7
    %v178 = vsub.s32 3, %v177
    %v179 = vrot.slane %v83, %v178
    %v248 = vunpack.c.l.b16 %v99
    %v249 = vunpack.c.h.b16 %v99
    %v250 = vunpack.c.l.b16 %v100
    %v251 = vunpack.c.h.b16 %v100
    %v252 = vunpack.c.l.b16 %v101
    %v253 = vunpack.c.h.b16 %v101
    %v254 = vunpack.c.l.b16 %v102
    %v255 = vunpack.c.h.b16 %v102
    %v256 = vunpack.c.l.b16 %v103
    %v257 = vunpack.c.h.b16 %v103
    %v258 = vunpack.c.l.b16 %v104
    %v259 = vunpack.c.h.b16 %v104
    %v260 = vunpack.c.l.b16 %v105
    %v261 = vunpack.c.h.b16 %v105
    %v262 = vunpack.c.l.b16 %v106
    %v263 = vunpack.c.h.b16 %v106
    %v264 = vunpack.c.l.b16 %v107
    %v265 = vunpack.c.h.b16 %v107
    %v266 = vunpack.c.l.b16 %v108
    %v267 = vunpack.c.h.b16 %v108
    %v268 = vunpack.c.l.b16 %v109
    %v269 = vunpack.c.h.b16 %v109
    %v270 = vunpack.c.l.b16 %v110
    %v271 = vunpack.c.h.b16 %v110
    %v272 = vunpack.c.l.b16 %v111
    %v273 = vunpack.c.h.b16 %v111
    %v274 = vunpack.c.l.b16 %v112
    %v275 = vunpack.c.h.b16 %v112
    %v276 = vunpack.c.l.b16 %v113
    %v277 = vunpack.c.h.b16 %v113
    %v278 = vunpack.c.l.b16 %v114
    %v279 = vunpack.c.h.b16 %v114
    %v280 = vunpack.c.l.b16 %v115
    %v281 = vunpack.c.h.b16 %v115
    %v282 = vunpack.c.l.b16 %v116
    %v283 = vunpack.c.h.b16 %v116
    %v284 = vunpack.c.l.b16 %v117
    %v285 = vunpack.c.h.b16 %v117
    %v286 = vunpack.c.l.b16 %v118
    %v287 = vunpack.c.h.b16 %v118
    %v288 = vunpack.c.l.b16 %v119
    %v289 = vunpack.c.h.b16 %v119
    %v290 = vunpack.c.l.b16 %v120
    %v291 = vunpack.c.h.b16 %v120
    %v292 = vunpack.c.l.b16 %v121
    %v293 = vunpack.c.h.b16 %v121
    %v294 = vunpack.c.l.b16 %v122
    %v295 = vunpack.c.h.b16 %v122
    %v296 = vunpack.c.l.b16 %v123
    %v297 = vunpack.c.h.b16 %v123
    %v298 = vunpack.c.l.b16 %v124
    %v299 = vunpack.c.h.b16 %v124
    %v300 = vunpack.c.l.b16 %v125
    %v301 = vunpack.c.h.b16 %v125
    %v302 = vunpack.c.l.b16 %v126
    %v303 = vunpack.c.h.b16 %v126
    %v304 = vunpack.c.l.b16 %v127
    %v305 = vunpack.c.h.b16 %v127
    %v306 = vunpack.c.l.b16 %v128
    %v307 = vunpack.c.h.b16 %v128
    %v308 = vunpack.c.l.b16 %v129
    %v309 = vunpack.c.h.b16 %v129
    %v310 = vunpack.c.l.b16 %v130
    %v311 = vunpack.c.h.b16 %v130
    %v312 = vunpack.c.l.b16 %v131
    %v313 = vunpack.c.h.b16 %v131
    %v314 = vunpack.c.l.b16 %v132
    %v315 = vunpack.c.h.b16 %v132
    %v316 = vunpack.c.l.b16 %v133
    %v317 = vunpack.c.h.b16 %v133
    %v318 = vunpack.c.l.b16 %v134
    %v319 = vunpack.c.h.b16 %v134
    %v320 = vunpack.c.l.b16 %v135
    %v321 = vunpack.c.h.b16 %v135
    %v322 = vunpack.c.l.b16 %v136
    %v323 = vunpack.c.h.b16 %v136
    %v324 = vunpack.c.l.b16 %v137
    %v325 = vunpack.c.h.b16 %v137
    %v326 = vunpack.c.l.b16 %v138
    %v327 = vunpack.c.h.b16 %v138
    %v328 = vunpack.c.l.b16 %v139
    %v329 = vunpack.c.h.b16 %v139
    %v330 = vunpack.c.l.b16 %v140
    %v331 = vunpack.c.h.b16 %v140
    %v332 = vunpack.c.l.b16 %v141
    %v333 = vunpack.c.h.b16 %v141
    %v334 = vunpack.c.l.b16 %v142
    %v335 = vunpack.c.h.b16 %v142
    %v336 = vunpack.c.l.b16 %v143
    %v337 = vunpack.c.h.b16 %v143
    %v338 = vunpack.c.l.b16 %v144
    %v339 = vunpack.c.h.b16 %v144
    %v340 = vunpack.c.l.b16 %v145
    %v341 = vunpack.c.h.b16 %v145
    %v342 = vunpack.c.l.b16 %v146
    %v343 = vunpack.c.h.b16 %v146
    %v344 = vunpack.c.l.b16 %v147
    %v345 = vunpack.c.h.b16 %v147
    %v346 = vunpack.c.l.b16 %v148
    %v347 = vunpack.c.h.b16 %v148
    %v348 = vunpack.c.l.b16 %v149
    %v349 = vunpack.c.h.b16 %v149
    %v350 = vunpack.c.l.b16 %v150
    %v351 = vunpack.c.h.b16 %v150
    %v352 = vunpack.c.l.b16 %v151
    %v353 = vunpack.c.h.b16 %v151
    %v354 = vunpack.c.l.b16 %v152
    %v355 = vunpack.c.h.b16 %v152
    %v356 = vunpack.c.l.b16 %v153
    %v357 = vunpack.c.h.b16 %v153
    %v358 = vunpack.c.l.b16 %v154
    %v359 = vunpack.c.h.b16 %v154
    %v360 = vunpack.c.l.b16 %v155
    %v361 = vunpack.c.h.b16 %v155
    %v362 = vunpack.c.l.b16 %v156
    %v363 = vunpack.c.h.b16 %v156
    %v364 = vunpack.c.l.b16 %v157
    %v365 = vunpack.c.h.b16 %v157
    %v366 = vunpack.c.l.b16 %v158
    %v367 = vunpack.c.h.b16 %v158
    %v368 = vunpack.c.l.b16 %v159
    %v369 = vunpack.c.h.b16 %v159
    %v370 = vunpack.c.l.b16 %v160
    %v371 = vunpack.c.h.b16 %v160
    %v372 = vunpack.c.l.b16 %v161
    %v373 = vunpack.c.h.b16 %v161
    %v374 = vunpack.c.l.b16 %v162
    %v375 = vunpack.c.h.b16 %v162
    %v376 = vpack.c.b16 %v252, %v248
    %v377 = vpack.c.b16 %v253, %v249
    %v378 = vpack.c.b16 %v254, %v250
    %v379 = vpack.c.b16 %v255, %v251
    %v380 = vpack.c.b16 %v260, %v256
    %v381 = vpack.c.b16 %v261, %v257
    %v382 = vpack.c.b16 %v262, %v258
    %v383 = vpack.c.b16 %v263, %v259
    %v384 = vpack.c.b16 %v268, %v264
    %v385 = vpack.c.b16 %v269, %v265
    %v386 = vpack.c.b16 %v270, %v266
    %v387 = vpack.c.b16 %v271, %v267
    %v388 = vpack.c.b16 %v276, %v272
    %v389 = vpack.c.b16 %v277, %v273
    %v390 = vpack.c.b16 %v278, %v274
    %v391 = vpack.c.b16 %v279, %v275
    %v392 = vpack.c.b16 %v284, %v280
    %v393 = vpack.c.b16 %v285, %v281
    %v394 = vpack.c.b16 %v286, %v282
    %v395 = vpack.c.b16 %v287, %v283
    %v396 = vpack.c.b16 %v292, %v288
    %v397 = vpack.c.b16 %v293, %v289
    %v398 = vpack.c.b16 %v294, %v290
    %v399 = vpack.c.b16 %v295, %v291
    %v400 = vpack.c.b16 %v300, %v296
    %v401 = vpack.c.b16 %v301, %v297
    %v402 = vpack.c.b16 %v302, %v298
    %v403 = vpack.c.b16 %v303, %v299
    %v404 = vpack.c.b16 %v308, %v304
    %v405 = vpack.c.b16 %v309, %v305
    %v406 = vpack.c.b16 %v310, %v306
    %v407 = vpack.c.b16 %v311, %v307
    %v408 = vpack.c.b16 %v316, %v312
    %v409 = vpack.c.b16 %v317, %v313
    %v410 = vpack.c.b16 %v318, %v314
    %v411 = vpack.c.b16 %v319, %v315
    %v412 = vpack.c.b16 %v324, %v320
    %v413 = vpack.c.b16 %v325, %v321
    %v414 = vpack.c.b16 %v326, %v322
    %v415 = vpack.c.b16 %v327, %v323
    %v416 = vpack.c.b16 %v332, %v328
    %v417 = vpack.c.b16 %v333, %v329
    %v418 = vpack.c.b16 %v334, %v330
    %v419 = vpack.c.b16 %v335, %v331
    %v420 = vpack.c.b16 %v340, %v336
    %v421 = vpack.c.b16 %v341, %v337
    %v422 = vpack.c.b16 %v342, %v338
    %v423 = vpack.c.b16 %v343, %v339
    %v424 = vpack.c.b16 %v348, %v344
    %v425 = vpack.c.b16 %v349, %v345
    %v426 = vpack.c.b16 %v350, %v346
    %v427 = vpack.c.b16 %v351, %v347
    %v428 = vpack.c.b16 %v356, %v352
    %v429 = vpack.c.b16 %v357, %v353
    %v430 = vpack.c.b16 %v358, %v354
    %v431 = vpack.c.b16 %v359, %v355
    %v432 = vpack.c.b16 %v364, %v360
    %v433 = vpack.c.b16 %v365, %v361
    %v434 = vpack.c.b16 %v366, %v362
    %v435 = vpack.c.b16 %v367, %v363
    %v436 = vpack.c.b16 %v372, %v368
    %v437 = vpack.c.b16 %v373, %v369
    %v438 = vpack.c.b16 %v374, %v370
    %v439 = vpack.c.b16 %v375, %v371
    %504 = vmatprep.subr.bf16.mxu0 %v405
    %505 = vmatpush1.bf16.msra.mxu0 %v404
    %506 = vmatprep.subr.bf16.mxu0 %v401
    %507 = vmatpush1.bf16.msra.mxu0 %v400
    %508 = vmatprep.subr.bf16.mxu0 %v397
    %509 = vmatpush1.bf16.msra.mxu0 %v396
    %510 = vmatprep.subr.bf16.mxu0 %v393
    %511 = vmatpush1.bf16.msra.mxu0 %v392
    %512 = vmatprep.subr.bf16.mxu0 %v389
    %513 = vmatpush1.bf16.msra.mxu0 %v388
    %514 = vmatprep.subr.bf16.mxu0 %v385
    %515 = vmatpush1.bf16.msra.mxu0 %v384
    %516 = vmatprep.subr.bf16.mxu0 %v381
    %517 = vmatpush1.bf16.msra.mxu0 %v380
    %518 = vmatprep.subr.bf16.mxu0 %v377
    %519 = vmatpush1.bf16.msra.mxu0 %v376
    %520 = vmatprep.subr.bf16.mxu0 %v437
    %521 = vmatpush2.bf16.msra.mxu0 %v436
    %522 = vmatprep.subr.bf16.mxu0 %v433
    %523 = vmatpush2.bf16.msra.mxu0 %v432
    %524 = vmatprep.subr.bf16.mxu0 %v429
    %525 = vmatpush2.bf16.msra.mxu0 %v428
    %526 = vmatprep.subr.bf16.mxu0 %v425
    %527 = vmatpush2.bf16.msra.mxu0 %v424
    %528 = vmatprep.subr.bf16.mxu0 %v421
    %529 = vmatpush2.bf16.msra.mxu0 %v420
    %530 = vmatprep.subr.bf16.mxu0 %v417
    %531 = vmatpush2.bf16.msra.mxu0 %v416
    %532 = vmatprep.subr.bf16.mxu0 %v413
    %533 = vmatpush2.bf16.msra.mxu0 %v412
    %534 = vmatprep.subr.bf16.mxu0 %v409
    %535 = vmatpush2.bf16.msra.mxu0 %v408
    %536 = vmatprep.mubr.bf16.mxu0 %v98
    %537 = vmatmul.mubr.bf16.gmra.mxu0 %v95
    %v538 = vpop.f32.mrf.mxu0
    %v539 = vadd.f32 %v167, %v538
    %v540 = vpop.f32.mrf.mxu0
    %v541 = vadd.f32 %v171, %v540
    %v542 = vpop.f32.mrf.mxu0
    %v543 = vpop.f32.mrf.mxu0
    %544 = vdwg.mxu0
    %545 = vmatprep.subr.bf16.mxu0 %v407
    %546 = vmatpush1.bf16.msra.mxu0 %v406
    %547 = vmatprep.subr.bf16.mxu0 %v403
    %548 = vmatpush1.bf16.msra.mxu0 %v402
    %549 = vmatprep.subr.bf16.mxu0 %v399
    %550 = vmatpush1.bf16.msra.mxu0 %v398
    %551 = vmatprep.subr.bf16.mxu0 %v395
    %552 = vmatpush1.bf16.msra.mxu0 %v394
    %553 = vmatprep.subr.bf16.mxu0 %v391
    %554 = vmatpush1.bf16.msra.mxu0 %v390
    %555 = vmatprep.subr.bf16.mxu0 %v387
    %556 = vmatpush1.bf16.msra.mxu0 %v386
    %557 = vmatprep.subr.bf16.mxu0 %v383
    %558 = vmatpush1.bf16.msra.mxu0 %v382
    %559 = vmatprep.subr.bf16.mxu0 %v379
    %560 = vmatpush1.bf16.msra.mxu0 %v378
    %561 = vmatprep.subr.bf16.mxu0 %v439
    %562 = vmatpush2.bf16.msra.mxu0 %v438
    %563 = vmatprep.subr.bf16.mxu0 %v435
    %564 = vmatpush2.bf16.msra.mxu0 %v434
    %565 = vmatprep.subr.bf16.mxu0 %v431
    %566 = vmatpush2.bf16.msra.mxu0 %v430
    %567 = vmatprep.subr.bf16.mxu0 %v427
    %568 = vmatpush2.bf16.msra.mxu0 %v426
    %569 = vmatprep.subr.bf16.mxu0 %v423
    %570 = vmatpush2.bf16.msra.mxu0 %v422
    %571 = vmatprep.subr.bf16.mxu0 %v419
    %572 = vmatpush2.bf16.msra.mxu0 %v418
    %573 = vmatprep.subr.bf16.mxu0 %v415
    %574 = vmatpush2.bf16.msra.mxu0 %v414
    %575 = vmatprep.subr.bf16.mxu0 %v411
    %576 = vmatpush2.bf16.msra.mxu0 %v410
    %577 = vmatprep.mubr.bf16.mxu0 %v98
    %578 = vmatmul.mubr.bf16.gmra.mxu0 %v95
    %v579 = vpop.f32.mrf.mxu0
    %v580 = vadd.f32 %v175, %v579
    %v581 = vpop.f32.mrf.mxu0
    %v582 = vadd.f32 %v179, %v581
    %v583 = vpop.f32.mrf.mxu0
    %v584 = vpop.f32.mrf.mxu0
    %585 = vdwg.mxu0
    %v586 = vxor.u32 %v539, 2147483648
    %v587 = vmul.f32 %v586, 1.442695
    %v588 = vpow.pop %v587
    %v589 = vadd.f32 %v588, 1.0
    %v590 = vrcp.pop %v589
    %v591 = vmul.f32 1.0, %v590
    %v592 = vxor.u32 %v541, 2147483648
    %v593 = vmul.f32 %v592, 1.442695
    %v594 = vpow.pop %v593
    %v595 = vadd.f32 %v594, 1.0
    %v596 = vrcp.pop %v595
    %v597 = vmul.f32 1.0, %v596
    %v598 = vtanh.pop %v580
    %v599 = vxor.u32 %v582, 2147483648
    %v600 = vmul.f32 %v599, 1.442695
    %v601 = vpow.pop %v600
    %v602 = vadd.f32 %v601, 1.0
    %v603 = vrcp.pop %v602
    %v604 = vmul.f32 1.0, %v603
    %v605 = vmul.f32 %v597, %v97
    %v606 = vmul.f32 %v591, %v598
    %v607 = vadd.f32 %v605, %v606
    %v608 = vtanh.pop %v607
    %v609 = vmul.f32 %v604, %v608
    %v610 = vld [vmem:[#allocation8] sm:$0xf]
    %v611 = vld [vmem:[#allocation8 + $0x4] sm:$0xf]
    %v612 = vld [vmem:[#allocation8 + $0x8] sm:$0xf]
    %v613 = vld [vmem:[#allocation8 + $0xc] sm:$0xf]
    %v614 = vld [vmem:[#allocation8 + $0x10] sm:$0xf]
    %v615 = vld [vmem:[#allocation8 + $0x14] sm:$0xf]
    %v616 = vld [vmem:[#allocation8 + $0x18] sm:$0xf]
    %v617 = vld [vmem:[#allocation8 + $0x1c] sm:$0xf]
    %v618 = vld [vmem:[#allocation8 + $0x20] sm:$0xf]
    %v619 = vld [vmem:[#allocation8 + $0x24] sm:$0xf]
    %v620 = vld [vmem:[#allocation8 + $0x28] sm:$0xf]
    %v621 = vld [vmem:[#allocation8 + $0x2c] sm:$0xf]
    %v622 = vld [vmem:[#allocation8 + $0x30] sm:$0xf]
    %v623 = vld [vmem:[#allocation8 + $0x34] sm:$0xf]
    %v624 = vld [vmem:[#allocation8 + $0x38] sm:$0xf]
    %v625 = vld [vmem:[#allocation8 + $0x3c] sm:$0xf]
    %v626 = vld [vmem:[#allocation8 + $0x40] sm:$0xf]
    %v627 = vld [vmem:[#allocation8 + $0x44] sm:$0xf]
    %v628 = vld [vmem:[#allocation8 + $0x48] sm:$0xf]
    %v629 = vld [vmem:[#allocation8 + $0x4c] sm:$0xf]
    %v630 = vld [vmem:[#allocation8 + $0x50] sm:$0xf]
    %v631 = vld [vmem:[#allocation8 + $0x54] sm:$0xf]
    %v632 = vld [vmem:[#allocation8 + $0x58] sm:$0xf]
    %v633 = vld [vmem:[#allocation8 + $0x5c] sm:$0xf]
    %v634 = vld [vmem:[#allocation8 + $0x60] sm:$0xf]
    %v635 = vld [vmem:[#allocation8 + $0x64] sm:$0xf]
    %v636 = vld [vmem:[#allocation8 + $0x68] sm:$0xf]
    %v637 = vld [vmem:[#allocation8 + $0x6c] sm:$0xf]
    %v638 = vld [vmem:[#allocation8 + $0x70] sm:$0xf]
    %v639 = vld [vmem:[#allocation8 + $0x74] sm:$0xf]
    %v640 = vld [vmem:[#allocation8 + $0x78] sm:$0xf]
    %v641 = vld [vmem:[#allocation8 + $0x7c] sm:$0xf]
    %v642 = vld [vmem:[#allocation8 + $0x80] sm:$0xf]
    %v643 = vld [vmem:[#allocation8 + $0x84] sm:$0xf]
    %v644 = vld [vmem:[#allocation8 + $0x88] sm:$0xf]
    %v645 = vld [vmem:[#allocation8 + $0x8c] sm:$0xf]
    %v646 = vld [vmem:[#allocation8 + $0x90] sm:$0xf]
    %v647 = vld [vmem:[#allocation8 + $0x94] sm:$0xf]
    %v648 = vld [vmem:[#allocation8 + $0x98] sm:$0xf]
    %v649 = vld [vmem:[#allocation8 + $0x9c] sm:$0xf]
    %v650 = vld [vmem:[#allocation8 + $0xa0] sm:$0xf]
    %v651 = vld [vmem:[#allocation8 + $0xa4] sm:$0xf]
    %v652 = vld [vmem:[#allocation8 + $0xa8] sm:$0xf]
    %v653 = vld [vmem:[#allocation8 + $0xac] sm:$0xf]
    %v654 = vld [vmem:[#allocation8 + $0xb0] sm:$0xf]
    %v655 = vld [vmem:[#allocation8 + $0xb4] sm:$0xf]
    %v656 = vld [vmem:[#allocation8 + $0xb8] sm:$0xf]
    %v657 = vld [vmem:[#allocation8 + $0xbc] sm:$0xf]
    %v658 = vld [vmem:[#allocation8 + $0xc0] sm:$0xf]
    %v659 = vld [vmem:[#allocation8 + $0xc4] sm:$0xf]
    %v660 = vld [vmem:[#allocation8 + $0xc8] sm:$0xf]
    %v661 = vld [vmem:[#allocation8 + $0xcc] sm:$0xf]
    %v662 = vld [vmem:[#allocation8 + $0xd0] sm:$0xf]
    %v663 = vld [vmem:[#allocation8 + $0xd4] sm:$0xf]
    %v664 = vld [vmem:[#allocation8 + $0xd8] sm:$0xf]
    %v665 = vld [vmem:[#allocation8 + $0xdc] sm:$0xf]
    %v666 = vld [vmem:[#allocation8 + $0xe0] sm:$0xf]
    %v667 = vld [vmem:[#allocation8 + $0xe4] sm:$0xf]
    %v668 = vld [vmem:[#allocation8 + $0xe8] sm:$0xf]
    %v669 = vld [vmem:[#allocation8 + $0xec] sm:$0xf]
    %v670 = vld [vmem:[#allocation8 + $0xf0] sm:$0xf]
    %v671 = vld [vmem:[#allocation8 + $0xf4] sm:$0xf]
    %v672 = vld [vmem:[#allocation8 + $0xf8] sm:$0xf]
    %v673 = vld [vmem:[#allocation8 + $0xfc] sm:$0xf]
    %v674 = vpack.c.bf16 %v609, %v609
    %v675 = vld [vmem:[#allocation5] sm:$0xff]
    %v676 = vld [vmem:[#allocation5 + $0x8] sm:$0xff]
    %v677 = vpack.c.bf16 %v675, %v675
    %v678 = vpack.c.bf16 %v676, %v676
    %v680 = vlaneseq
    %v681 = vshrl.u32 %v680, 7
    %v682 = vsub.s32 0, %v681
    %v683 = vrot.slane %v84, %v682
    %v733 = vunpack.c.l.b16 %v610
    %v734 = vunpack.c.l.b16 %v611
    %v735 = vunpack.c.l.b16 %v612
    %v736 = vunpack.c.l.b16 %v613
    %v737 = vunpack.c.l.b16 %v614
    %v738 = vunpack.c.l.b16 %v615
    %v739 = vunpack.c.l.b16 %v616
    %v740 = vunpack.c.l.b16 %v617
    %v741 = vunpack.c.l.b16 %v618
    %v742 = vunpack.c.l.b16 %v619
    %v743 = vunpack.c.l.b16 %v620
    %v744 = vunpack.c.l.b16 %v621
    %v745 = vunpack.c.l.b16 %v622
    %v746 = vunpack.c.l.b16 %v623
    %v747 = vunpack.c.l.b16 %v624
    %v748 = vunpack.c.l.b16 %v625
    %v749 = vunpack.c.l.b16 %v626
    %v750 = vunpack.c.l.b16 %v627
    %v751 = vunpack.c.l.b16 %v628
    %v752 = vunpack.c.l.b16 %v629
    %v753 = vunpack.c.l.b16 %v630
    %v754 = vunpack.c.l.b16 %v631
    %v755 = vunpack.c.l.b16 %v632
    %v756 = vunpack.c.l.b16 %v633
    %v757 = vunpack.c.l.b16 %v634
    %v758 = vunpack.c.l.b16 %v635
    %v759 = vunpack.c.l.b16 %v636
    %v760 = vunpack.c.l.b16 %v637
    %v761 = vunpack.c.l.b16 %v638
    %v762 = vunpack.c.l.b16 %v639
    %v763 = vunpack.c.l.b16 %v640
    %v764 = vunpack.c.l.b16 %v641
    %v765 = vunpack.c.l.b16 %v642
    %v766 = vunpack.c.l.b16 %v643
    %v767 = vunpack.c.l.b16 %v644
    %v768 = vunpack.c.l.b16 %v645
    %v769 = vunpack.c.l.b16 %v646
    %v770 = vunpack.c.l.b16 %v647
    %v771 = vunpack.c.l.b16 %v648
    %v772 = vunpack.c.l.b16 %v649
    %v773 = vunpack.c.l.b16 %v650
    %v774 = vunpack.c.l.b16 %v651
    %v775 = vunpack.c.l.b16 %v652
    %v776 = vunpack.c.l.b16 %v653
    %v777 = vunpack.c.l.b16 %v654
    %v778 = vunpack.c.l.b16 %v655
    %v779 = vunpack.c.l.b16 %v656
    %v780 = vunpack.c.l.b16 %v657
    %v781 = vpack.c.b16 %v734, %v733
    %v782 = vpack.c.b16 %v736, %v735
    %v783 = vpack.c.b16 %v738, %v737
    %v784 = vpack.c.b16 %v740, %v739
    %v785 = vpack.c.b16 %v742, %v741
    %v786 = vpack.c.b16 %v744, %v743
    %v787 = vpack.c.b16 %v746, %v745
    %v788 = vpack.c.b16 %v748, %v747
    %v789 = vpack.c.b16 %v750, %v749
    %v790 = vpack.c.b16 %v752, %v751
    %v791 = vpack.c.b16 %v754, %v753
    %v792 = vpack.c.b16 %v756, %v755
    %v793 = vpack.c.b16 %v758, %v757
    %v794 = vpack.c.b16 %v760, %v759
    %v795 = vpack.c.b16 %v762, %v761
    %v796 = vpack.c.b16 %v764, %v763
    %v797 = vpack.c.b16 %v766, %v765
    %v798 = vpack.c.b16 %v768, %v767
    %v799 = vpack.c.b16 %v770, %v769
    %v800 = vpack.c.b16 %v772, %v771
    %v801 = vpack.c.b16 %v774, %v773
    %v802 = vpack.c.b16 %v776, %v775
    %v803 = vpack.c.b16 %v778, %v777
    %v804 = vpack.c.b16 %v780, %v779
    %829 = vmatprep.subr.bf16.mxu0 0
    %830 = vmatpush1.bf16.msra.mxu0 %v788
    %831 = vmatprep.subr.bf16.mxu0 0
    %832 = vmatpush1.bf16.msra.mxu0 %v787
    %833 = vmatprep.subr.bf16.mxu0 0
    %834 = vmatpush1.bf16.msra.mxu0 %v786
    %835 = vmatprep.subr.bf16.mxu0 0
    %836 = vmatpush1.bf16.msra.mxu0 %v785
    %837 = vmatprep.subr.bf16.mxu0 0
    %838 = vmatpush1.bf16.msra.mxu0 %v784
    %839 = vmatprep.subr.bf16.mxu0 0
    %840 = vmatpush1.bf16.msra.mxu0 %v783
    %841 = vmatprep.subr.bf16.mxu0 0
    %842 = vmatpush1.bf16.msra.mxu0 %v782
    %843 = vmatprep.subr.bf16.mxu0 0
    %844 = vmatpush1.bf16.msra.mxu0 %v781
    %845 = vmatprep.subr.bf16.mxu0 0
    %846 = vmatpush2.bf16.msra.mxu0 %v796
    %847 = vmatprep.subr.bf16.mxu0 0
    %848 = vmatpush2.bf16.msra.mxu0 %v795
    %849 = vmatprep.subr.bf16.mxu0 0
    %850 = vmatpush2.bf16.msra.mxu0 %v794
    %851 = vmatprep.subr.bf16.mxu0 0
    %852 = vmatpush2.bf16.msra.mxu0 %v793
    %853 = vmatprep.subr.bf16.mxu0 0
    %854 = vmatpush2.bf16.msra.mxu0 %v792
    %855 = vmatprep.subr.bf16.mxu0 0
    %856 = vmatpush2.bf16.msra.mxu0 %v791
    %857 = vmatprep.subr.bf16.mxu0 0
    %858 = vmatpush2.bf16.msra.mxu0 %v790
    %859 = vmatprep.subr.bf16.mxu0 0
    %860 = vmatpush2.bf16.msra.mxu0 %v789
    %861 = vmatprep.mubr.bf16.mxu0 %v677
    %862 = vmatmul.mubr.bf16.gmra.mxu0 %v674
    %v863 = vpop.f32.mrf.mxu0
    %v864 = vadd.f32 %v683, %v863
    %v865 = vpop.f32.mrf.mxu0
    %v866 = vpop.f32.mrf.mxu0
    %v867 = vpop.f32.mrf.mxu0
    %868 = vdwg.mxu0
    %869 = vmatprep.subr.bf16.mxu0 0
    %870 = vmatpush1.bf16.msra.mxu0 %v804
    %871 = vmatprep.subr.bf16.mxu0 0
    %872 = vmatpush1.bf16.msra.mxu0 %v803
    %873 = vmatprep.subr.bf16.mxu0 0
    %874 = vmatpush1.bf16.msra.mxu0 %v802
    %875 = vmatprep.subr.bf16.mxu0 0
    %876 = vmatpush1.bf16.msra.mxu0 %v801
    %877 = vmatprep.subr.bf16.mxu0 0
    %878 = vmatpush1.bf16.msra.mxu0 %v800
    %879 = vmatprep.subr.bf16.mxu0 0
    %880 = vmatpush1.bf16.msra.mxu0 %v799
    %881 = vmatprep.subr.bf16.mxu0 0
    %882 = vmatpush1.bf16.msra.mxu0 %v798
    %883 = vmatprep.subr.bf16.mxu0 0
    %884 = vmatpush1.bf16.msra.mxu0 %v797
    %885 = vmatprep.subr.bf16.mxu0 0
    %886 = vmatpush2.bf16.msra.mxu0 0
    %887 = vmatprep.subr.bf16.mxu0 0
    %888 = vmatpush2.bf16.msra.mxu0 0
    %889 = vmatprep.subr.bf16.mxu0 0
    %890 = vmatpush2.bf16.msra.mxu0 0
    %891 = vmatprep.subr.bf16.mxu0 0
    %892 = vmatpush2.bf16.msra.mxu0 0
    %893 = vmatprep.subr.bf16.mxu0 0
    %894 = vmatpush2.bf16.msra.mxu0 0
    %895 = vmatprep.subr.bf16.mxu0 0
    %896 = vmatpush2.bf16.msra.mxu0 0
    %897 = vmatprep.subr.bf16.mxu0 0
    %898 = vmatpush2.bf16.msra.mxu0 0
    %899 = vmatprep.subr.bf16.mxu0 0
    %900 = vmatpush2.bf16.msra.mxu0 0
    %901 = vmatprep.mubr.bf16.mxu0 0
    %902 = vmatmul.mubr.bf16.gmra.mxu0 %v678
    %v903 = vpop.f32.mrf.mxu0
    %v904 = vadd.f32 %v864, %v903
    %v905 = vpop.f32.mrf.mxu0
    %v906 = vpop.f32.mrf.mxu0
    %v907 = vpop.f32.mrf.mxu0
    %908 = vdwg.mxu0
    %v909 = vpack.c.bf16 %v904, %v904
    %v911 = vlaneseq
    %v912 = vshrl.u32 %v911, 7
    %v913 = vsub.s32 0, %v912
    %v914 = vrot.slane %v85, %v913
    %v932 = vunpack.c.l.b16 %v658
    %v933 = vunpack.c.l.b16 %v659
    %v934 = vunpack.c.l.b16 %v660
    %v935 = vunpack.c.l.b16 %v661
    %v936 = vunpack.c.l.b16 %v662
    %v937 = vunpack.c.l.b16 %v663
    %v938 = vunpack.c.l.b16 %v664
    %v939 = vunpack.c.l.b16 %v665
    %v940 = vunpack.c.l.b16 %v666
    %v941 = vunpack.c.l.b16 %v667
    %v942 = vunpack.c.l.b16 %v668
    %v943 = vunpack.c.l.b16 %v669
    %v944 = vunpack.c.l.b16 %v670
    %v945 = vunpack.c.l.b16 %v671
    %v946 = vunpack.c.l.b16 %v672
    %v947 = vunpack.c.l.b16 %v673
    %v948 = vpack.c.b16 %v933, %v932
    %v949 = vpack.c.b16 %v935, %v934
    %v950 = vpack.c.b16 %v937, %v936
    %v951 = vpack.c.b16 %v939, %v938
    %v952 = vpack.c.b16 %v941, %v940
    %v953 = vpack.c.b16 %v943, %v942
    %v954 = vpack.c.b16 %v945, %v944
    %v955 = vpack.c.b16 %v947, %v946
    %964 = vmatprep.subr.bf16.mxu0 0
    %965 = vmatpush1.bf16.msra.mxu0 %v955
    %966 = vmatprep.subr.bf16.mxu0 0
    %967 = vmatpush1.bf16.msra.mxu0 %v954
    %968 = vmatprep.subr.bf16.mxu0 0
    %969 = vmatpush1.bf16.msra.mxu0 %v953
    %970 = vmatprep.subr.bf16.mxu0 0
    %971 = vmatpush1.bf16.msra.mxu0 %v952
    %972 = vmatprep.subr.bf16.mxu0 0
    %973 = vmatpush1.bf16.msra.mxu0 %v951
    %974 = vmatprep.subr.bf16.mxu0 0
    %975 = vmatpush1.bf16.msra.mxu0 %v950
    %976 = vmatprep.subr.bf16.mxu0 0
    %977 = vmatpush1.bf16.msra.mxu0 %v949
    %978 = vmatprep.subr.bf16.mxu0 0
    %979 = vmatpush1.bf16.msra.mxu0 %v948
    %980 = vmatprep.subr.bf16.mxu0 0
    %981 = vmatpush2.bf16.msra.mxu0 0
    %982 = vmatprep.subr.bf16.mxu0 0
    %983 = vmatpush2.bf16.msra.mxu0 0
    %984 = vmatprep.subr.bf16.mxu0 0
    %985 = vmatpush2.bf16.msra.mxu0 0
    %986 = vmatprep.subr.bf16.mxu0 0
    %987 = vmatpush2.bf16.msra.mxu0 0
    %988 = vmatprep.subr.bf16.mxu0 0
    %989 = vmatpush2.bf16.msra.mxu0 0
    %990 = vmatprep.subr.bf16.mxu0 0
    %991 = vmatpush2.bf16.msra.mxu0 0
    %992 = vmatprep.subr.bf16.mxu0 0
    %993 = vmatpush2.bf16.msra.mxu0 0
    %994 = vmatprep.subr.bf16.mxu0 0
    %995 = vmatpush2.bf16.msra.mxu0 0
    %996 = vmatprep.mubr.bf16.mxu0 0
    %997 = vmatmul.mubr.bf16.gmra.mxu0 %v909
    %v998 = vpop.f32.mrf.mxu0
    %v999 = vadd.f32 %v914, %v998
    %v1000 = vpop.f32.mrf.mxu0
    %v1001 = vpop.f32.mrf.mxu0
    %v1002 = vpop.f32.mrf.mxu0
    %1003 = vdwg.mxu0
    %1004 = vmax.xlane.f32.xlu0 %v999
    %v1005 = vpop.xlane.xlu0 %1004
    %v1006 = vsub.f32 %v999, %v1005
    %v1007 = vmul.f32 %v1006, 1.442695
    %v1008 = vpow.pop %v1007
    %1009 = vadd.xlane.f32.xlu0 %v1008
    %v1010 = vpop.xlane.xlu0 %1009
    %v1011 = vrcp.pop %v1010
    %v1012 = vmul.f32 %v1008, %v1011
    %1013 = vst [vmem:[#allocation10] sm:$0xff] %v1012
    %1014 = vst [vmem:[#allocation11] sm:$0xff] %v609
    %1015 = vst [vmem:[#allocation13] sm:$0xff] %v607
    // Predicated region
    $region46: #{tpu_custom_call.1} parent=1 // pred_check
      _
    $region47: #{tpu_custom_call.1} parent=1 // pred_check_branch
      %1017 = sbr.rel (0) target = $region49
    $region48: #{tpu_custom_call.1} parent=1 // pred_region
      %s1019 = ssub.s32 128, 128
      %1020 = vsyncadd [#allocation4], %s1019
      %s1022 = sshll.u32 [#allocation10], 4
      %s1023 = int_to_ptr.vmem [resolvable:$true] %s1022
      %1025 = dma.vmem_to_hbm [thread:$0]  %s1023, 128, %s7, [#allocation4]
    $region49: #{tpu_custom_call.1} parent=1 // pred_fallthru
      _
    // Predicated region
    $region50: #{tpu_custom_call.1} parent=1 // pred_check
      _
    $region51: #{tpu_custom_call.1} parent=1 // pred_check_branch
      %1027 = sbr.rel (0) target = $region53
    $region52: #{tpu_custom_call.1} parent=1 // pred_region
      %s1029 = ssub.s32 128, 128
      %1030 = vsyncadd [#allocation12], %s1029
      %s1032 = sshll.u32 [#allocation11], 4
      %s1033 = int_to_ptr.vmem [resolvable:$true] %s1032
      %1035 = dma.vmem_to_hbm [thread:$0]  %s1033, 128, %s8, [#allocation12]
    $region53: #{tpu_custom_call.1} parent=1 // pred_fallthru
      _
    // Predicated region
    $region54: #{tpu_custom_call.1} parent=1 // pred_check
      _
    $region55: #{tpu_custom_call.1} parent=1 // pred_check_branch
      %1037 = sbr.rel (0) target = $region57
    $region56: #{tpu_custom_call.1} parent=1 // pred_region
      %s1039 = ssub.s32 128, 128
      %1040 = vsyncadd [#allocation12], %s1039
      %s1042 = sshll.u32 [#allocation13], 4
      %s1043 = int_to_ptr.vmem [resolvable:$true] %s1042
      %1045 = dma.vmem_to_hbm [thread:$0]  %s1043, 128, %s9, [#allocation12]
    $region57: #{tpu_custom_call.1} parent=1 // pred_fallthru
      _
    // Predicated region
    $region58: #{tpu_custom_call.1} parent=1 // pred_check
      _
    $region59: #{tpu_custom_call.1} parent=1 // pred_check_branch
      %1047 = sbr.rel (0) target = $region61
    $region60: #{tpu_custom_call.1} parent=1 // pred_region
      %1048 = dma.done [#allocation4], 128
    $region61: #{tpu_custom_call.1} parent=1 // pred_fallthru
      _
    // Predicated region
    $region62: #{tpu_custom_call.1} parent=1 // pred_check
      _
    $region63: #{tpu_custom_call.1} parent=1 // pred_check_branch
      %1050 = sbr.rel (0) target = $region65
    $region64: #{tpu_custom_call.1} parent=1 // pred_region
      %1051 = dma.done [#allocation12], 128
    $region65: #{tpu_custom_call.1} parent=1 // pred_fallthru
      _
    // Predicated region
    $region66: #{tpu_custom_call.1} parent=1 // pred_check
      _
    $region67: #{tpu_custom_call.1} parent=1 // pred_check_branch
      %1053 = sbr.rel (0) target = $region69
    $region68: #{tpu_custom_call.1} parent=1 // pred_region
      %1054 = dma.done [#allocation12], 128
    $region69: #{tpu_custom_call.1} parent=1 // pred_fallthru
      _
    %1055 = vsyncpa [#allocation3], 1
    %1056 = vsyncpa [#allocation6], 1
    %1057 = vsyncpa [#allocation9], 1
    %1058 = vsyncpa [#allocation4], 1
    %1059 = vsyncpa [#allocation12], 1

</llo_original>
